<compile_context>
chip_gen: v7x
topology: tpu7x:2x2x1
jax: 0.10.0
libtpu: 0.0.40
codegen_flags: <defaults>
</compile_context>

<pallas_src>
import jax
import jax.numpy as jnp
from jax.experimental import pallas as pl
from jax.experimental.pallas import tpu as pltpu

EPS = 1e-5
_VMEM_LIMIT = 32 * 1024 * 1024  # safe on v5e/v6e (128 MiB phys) and v7x (64 MiB phys)


def _pick_hw_tile(hw, c, itemsize, target_bytes=2 * 1024 * 1024):
    """Largest lane-aligned HW tile that divides HW and keeps one (1, C, tile)
    block under ~target_bytes so double-buffered in+out fits scoped VMEM."""
    if hw % 128 != 0:
        return hw  # not lane-aligned: use a full-extent block (allowed by Pallas)
    t = (max(target_bytes // max(1, c * itemsize), 128) // 128) * 128
    t = min(t, hw)
    while hw % t != 0:
        t -= 128
    return t


def _stats_kernel(x_ref, sum_ref, sumsq_ref):
    """Accumulate per-channel sum and sum-of-squares over all (N, HW) tiles."""
    @pl.when((pl.program_id(0) == 0) & (pl.program_id(1) == 0))
    def _():
        sum_ref[...] = jnp.zeros_like(sum_ref)
        sumsq_ref[...] = jnp.zeros_like(sumsq_ref)

    x = x_ref[...].astype(jnp.float32)                       # (1, C, tile_hw)
    sum_ref[...] += jnp.sum(x, axis=(0, 2), keepdims=True)   # (1, C, 1)
    sumsq_ref[...] += jnp.sum(x * x, axis=(0, 2), keepdims=True)


def _norm_kernel(x_ref, scale_ref, shift_ref, o_ref):
    """out = x * scale + shift (scale/shift are per-(N, C), broadcast over HW)."""
    x = x_ref[...]                                           # (1, C, tile_hw)
    # Keep elementwise math in bf16 when the activation is bf16 (v6e/v7x bf16
    # VALU; halves vreg pressure). f32 inputs stay in f32.
    cdt = jnp.bfloat16 if x.dtype == jnp.bfloat16 else jnp.float32
    scale = scale_ref[...].astype(cdt)                       # (1, C, 1)
    shift = shift_ref[...].astype(cdt)                       # (1, C, 1)
    o_ref[...] = (x.astype(cdt) * scale + shift).astype(o_ref.dtype)


def conditional_batch_norm_2d(x_nchw, y, embed_weight, num_features):
    """x_nchw: (N, C, H, W); y: (N,) int32 class ids;
    embed_weight: (num_classes, 2*num_features)."""
    N, C, H, W = x_nchw.shape
    assert C == num_features
    HW = H * W

    # Free, contiguous reshape -- stays in NCHW memory order (HW on lanes).
    x = x_nchw.reshape(N, C, HW)

    tile_hw = _pick_hw_tile(HW, C, x.dtype.itemsize)
    n_hw = HW // tile_hw

    # ---- Pass 1: streaming per-channel sum / sum-of-squares ------------------
    sums, sumsqs = pl.pallas_call(
        _stats_kernel,
        out_shape=(jax.ShapeDtypeStruct((1, C, 1), jnp.float32),
                   jax.ShapeDtypeStruct((1, C, 1), jnp.float32)),
        grid_spec=pltpu.PrefetchScalarGridSpec(
            num_scalar_prefetch=0,
            grid=(N, n_hw),
            in_specs=[pl.BlockSpec((1, C, tile_hw), lambda n, h: (n, 0, h))],
            out_specs=(pl.BlockSpec((1, C, 1), lambda n, h: (0, 0, 0)),
                       pl.BlockSpec((1, C, 1), lambda n, h: (0, 0, 0)))),
        compiler_params=pltpu.CompilerParams(
            dimension_semantics=("arbitrary", "arbitrary"),
            vmem_limit_bytes=_VMEM_LIMIT),
    )(x)

    # ---- Tiny glue (plain JAX, (N, C)-sized only) -----------------------------
    count = jnp.float32(N * HW)
    mean = sums / count                                       # (1, C, 1)
    var = jnp.maximum(sumsqs / count - mean * mean, 0.0)      # biased variance
    inv_std = 1.0 / jnp.sqrt(var + EPS)                       # (1, C, 1)

    emb = embed_weight[y].astype(jnp.float32)                 # (N, 2C) gather
    gamma = emb[:, :C].reshape(N, C, 1)
    beta = emb[:, C:].reshape(N, C, 1)
    scale = gamma * inv_std                                   # (N, C, 1)
    shift = beta - mean * scale                               # (N, C, 1)

    # ---- Pass 2: fused scale/shift FMA, tiled & pipelined ---------------------
    out = pl.pallas_call(
        _norm_kernel,
        out_shape=jax.ShapeDtypeStruct((N, C, HW), x_nchw.dtype),
        grid_spec=pltpu.PrefetchScalarGridSpec(
            num_scalar_prefetch=0,
            grid=(N, n_hw),
            in_specs=[
                pl.BlockSpec((1, C, tile_hw), lambda n, h: (n, 0, h)),
                # scale/shift do not vary along the HW axis -> DMA'd once per N
                pl.BlockSpec((1, C, 1), lambda n, h: (n, 0, 0)),
                pl.BlockSpec((1, C, 1), lambda n, h: (n, 0, 0)),
            ],
            out_specs=pl.BlockSpec((1, C, tile_hw), lambda n, h: (n, 0, h))),
        compiler_params=pltpu.CompilerParams(
            dimension_semantics=("parallel", "parallel"),
            vmem_limit_bytes=_VMEM_LIMIT),
    )(x, scale, shift)

    return out.reshape(N, C, H, W)


def reference(x_nchw, y, embed_weight, num_features):
    x = x_nchw.astype(jnp.float32)
    mean = jnp.mean(x, axis=(0, 2, 3), keepdims=True)
    var = jnp.mean((x - mean) ** 2, axis=(0, 2, 3), keepdims=True)
    norm = (x - mean) / jnp.sqrt(var + EPS)
    emb = embed_weight[y]
    gamma = emb[:, :num_features].reshape(-1, num_features, 1, 1)
    beta = emb[:, num_features:].reshape(-1, num_features, 1, 1)
    return (gamma * norm + beta).astype(x_nchw.dtype)


if __name__ == "__main__":
    num_features = 4
    num_classes = 10
    N, C, H, W = 2, num_features, 16, 16

    key = jax.random.PRNGKey(0)
    kx, ky, kw = jax.random.split(key, 3)
    x = jax.random.normal(kx, (N, C, H, W), dtype=jnp.float32)
    y = jax.random.randint(ky, (N,), 0, num_classes, dtype=jnp.int32)

    # Module __init__ sets embed[:, :C] = 1, embed[:, C:] = 0; add a small
    # deterministic perturbation (as if trained) so the gamma/beta path is
    # actually exercised by the check.
    embed_weight = jnp.concatenate(
        [jnp.ones((num_classes, num_features), jnp.float32),
         jnp.zeros((num_classes, num_features), jnp.float32)], axis=1)
    embed_weight = embed_weight + 0.1 * jax.random.normal(
        kw, embed_weight.shape, dtype=jnp.float32)

    out = conditional_batch_norm_2d(x, y, embed_weight, num_features)
    out = jax.block_until_ready(out)

    ref = reference(x, y, embed_weight, num_features)
    assert out.shape == (N, C, H, W)
    assert jnp.allclose(out, ref, atol=2e-5, rtol=2e-5), (
        float(jnp.max(jnp.abs(out - ref))))

    print("KERNEL_OK")
</pallas_src>

<mosaic_0001>
module attributes {stable_mosaic.version = 11 : i64} {
  func.func @_stats_kernel(%arg0: i32, %arg1: i32, %arg2: memref<1x4x256xf32, #tpu.memory_space<vmem>>, %arg3: memref<1x4x1xf32, #tpu.memory_space<vmem>>, %arg4: memref<1x4x1xf32, #tpu.memory_space<vmem>>) attributes {dimension_semantics = [#tpu.dimension_semantics<arbitrary>, #tpu.dimension_semantics<arbitrary>], iteration_bounds = array<i64: 2, 1>, scalar_prefetch = 0 : i64, scratch_operands = 0 : i64, tpu.core_type = #tpu.core_type<tc>, window_params = [{transform_indices = @transform_0, window_bounds = array<i64: 1, 4, 256>}, {pipeline_mode = #tpu.pipeline_mode<synchronous>, transform_indices = @transform_1, window_bounds = array<i64: 1, 4, 1>}, {pipeline_mode = #tpu.pipeline_mode<synchronous>, transform_indices = @transform_2, window_bounds = array<i64: 1, 4, 1>}]} {
    %c0_i32 = arith.constant 0 : i32
    %0 = arith.cmpi eq, %arg0, %c0_i32 : i32
    %c0_i32_0 = arith.constant 0 : i32
    %1 = arith.cmpi eq, %arg1, %c0_i32_0 : i32
    %2 = arith.andi %0, %1 : i1
    %3 = arith.extui %2 : i1 to i32
    %c0_i32_1 = arith.constant 0 : i32
    %4 = arith.cmpi ne, %3, %c0_i32_1 : i32
    scf.if %4 {
      %cst_17 = arith.constant 0.000000e+00 : f32
      %17 = vector.broadcast %cst_17 : f32 to vector<1x4x1xf32>
      %c0_18 = arith.constant 0 : index
      %c0_19 = arith.constant 0 : index
      %c0_20 = arith.constant 0 : index
      %18 = vector.load %arg3[%c0_18, %c0_19, %c0_20] : memref<1x4x1xf32, #tpu.memory_space<vmem>>, vector<1x4x1xf32>
      tpu.vector_store %arg3[%c0_18, %c0_19, %c0_20], %17 {strides = array<i32>} : memref<1x4x1xf32, #tpu.memory_space<vmem>>, vector<1x4x1xf32>,
      %cst_21 = arith.constant 0.000000e+00 : f32
      %19 = vector.broadcast %cst_21 : f32 to vector<1x4x1xf32>
      %c0_22 = arith.constant 0 : index
      %c0_23 = arith.constant 0 : index
      %c0_24 = arith.constant 0 : index
      %20 = vector.load %arg4[%c0_22, %c0_23, %c0_24] : memref<1x4x1xf32, #tpu.memory_space<vmem>>, vector<1x4x1xf32>
      tpu.vector_store %arg4[%c0_22, %c0_23, %c0_24], %19 {strides = array<i32>} : memref<1x4x1xf32, #tpu.memory_space<vmem>>, vector<1x4x1xf32>,
    } else {
    }
    %c0 = arith.constant 0 : index
    %c0_2 = arith.constant 0 : index
    %c0_3 = arith.constant 0 : index
    %5 = vector.load %arg2[%c0, %c0_2, %c0_3] : memref<1x4x256xf32, #tpu.memory_space<vmem>>, vector<1x4x256xf32>
    %c0_4 = arith.constant 0 : index
    %c0_5 = arith.constant 0 : index
    %c0_6 = arith.constant 0 : index
    %6 = vector.load %arg3[%c0_4, %c0_5, %c0_6] : memref<1x4x1xf32, #tpu.memory_space<vmem>>, vector<1x4x1xf32>
    %cst = arith.constant dense<0.000000e+00> : vector<4xf32>
    %7 = vector.multi_reduction <add>, %5, %cst [0, 2] : vector<1x4x256xf32> to vector<4xf32>
    %8 = vector.shape_cast %7 : vector<4xf32> to vector<1x4x1xf32>
    %9 = arith.addf %6, %8 : vector<1x4x1xf32>
    %c0_7 = arith.constant 0 : index
    %c0_8 = arith.constant 0 : index
    %c0_9 = arith.constant 0 : index
    %10 = vector.load %arg3[%c0_7, %c0_8, %c0_9] : memref<1x4x1xf32, #tpu.memory_space<vmem>>, vector<1x4x1xf32>
    tpu.vector_store %arg3[%c0_7, %c0_8, %c0_9], %9 {strides = array<i32>} : memref<1x4x1xf32, #tpu.memory_space<vmem>>, vector<1x4x1xf32>,
    %c0_10 = arith.constant 0 : index
    %c0_11 = arith.constant 0 : index
    %c0_12 = arith.constant 0 : index
    %11 = vector.load %arg4[%c0_10, %c0_11, %c0_12] : memref<1x4x1xf32, #tpu.memory_space<vmem>>, vector<1x4x1xf32>
    %12 = arith.mulf %5, %5 : vector<1x4x256xf32>
    %cst_13 = arith.constant dense<0.000000e+00> : vector<4xf32>
    %13 = vector.multi_reduction <add>, %12, %cst_13 [0, 2] : vector<1x4x256xf32> to vector<4xf32>
    %14 = vector.shape_cast %13 : vector<4xf32> to vector<1x4x1xf32>
    %15 = arith.addf %11, %14 : vector<1x4x1xf32>
    %c0_14 = arith.constant 0 : index
    %c0_15 = arith.constant 0 : index
    %c0_16 = arith.constant 0 : index
    %16 = vector.load %arg4[%c0_14, %c0_15, %c0_16] : memref<1x4x1xf32, #tpu.memory_space<vmem>>, vector<1x4x1xf32>
    tpu.vector_store %arg4[%c0_14, %c0_15, %c0_16], %15 {strides = array<i32>} : memref<1x4x1xf32, #tpu.memory_space<vmem>>, vector<1x4x1xf32>,
    return
  }
  func.func @transform_0(%arg0: i32, %arg1: i32) -> (i32, i32, i32) {
    %c0_i32 = arith.constant 0 : i32
    %c0_i32_0 = arith.constant 0 : i32
    return %arg0, %c0_i32, %arg1 : i32, i32, i32
  }
  func.func @transform_1(%arg0: i32, %arg1: i32) -> (i32, i32, i32) {
    %c0_i32 = arith.constant 0 : i32
    %c0_i32_0 = arith.constant 0 : i32
    %c0_i32_1 = arith.constant 0 : i32
    %c0_i32_2 = arith.constant 0 : i32
    return %c0_i32, %c0_i32_0, %c0_i32_1 : i32, i32, i32
  }
  func.func @transform_2(%arg0: i32, %arg1: i32) -> (i32, i32, i32) {
    %c0_i32 = arith.constant 0 : i32
    %c0_i32_0 = arith.constant 0 : i32
    %c0_i32_1 = arith.constant 0 : i32
    %c0_i32_2 = arith.constant 0 : i32
    return %c0_i32, %c0_i32_0, %c0_i32_1 : i32, i32, i32
  }
}

</mosaic_0001>

<llo_original>
// kernel: tpu_custom_call.1
$region0: #{tpu_custom_call.1}
  #allocation0 [shape = 'u32[]', space=smem, size = 0x4, offset = 0x4, fixed_abs, tag = 'smem constant byte address 0x4 - core index']
  #allocation1 [shape = 'u32[144,128]{1,0:T(1,128)}', space=vmem, size = 0x12000, scoped, tag = 'internal scratch']
  %s0 = inlined_call_operand.hbm [shape: f32[2,4,256], index: 0, kind: input, shape index: {}]
  %s1 = inlined_call_operand.vmem [shape: f32[1,4,1], index: 1, kind: output, shape index: {0}]
  %s2 = inlined_call_operand.vmem [shape: f32[1,4,1], index: 2, kind: output, shape index: {1}]
  %3 = xla_tuple %s1, %s2
  %s4 = sld [smem:[#allocation0]]
  $region53: #{tpu_custom_call.1} parent=0
    _
  %s6 = ssub.s32 1, %s4
  %s7 = scalar_select 0, %s6, %s4
  $region1: #{tpu_custom_call.1} parent=0
    #allocation2 [shape = 'u8[8192]{0}', space=vmem, size = 0x2000, scoped, tag = 'input window, operand 0']
    #allocation3 [shape = 's32[2]{0}', space=sflag, size = 0x8, scoped, tag = 'scoped memory for tpu_custom_call.1']
    %8 = vsyncpa [#allocation3], 0
    %s9 = scalar_lea.sflag [#allocation3], 1
    %10 = vsyncpa %s9, 0
    loop: start=0, step=1, limit=4
    $region2: #{tpu_custom_call.1} parent=1 // loop_pre_header
      _
    $region3: #{tpu_custom_call.1} parent=1 // loop_header
      %s12 = sphi 0, %s16
      %p13 = scmp.ge.s32.totalorder %s12, 4
      %s19 = sphi 0, %s31
      %s20 = sphi 0, %s27
      %s21 = sphi 0, %s19
      %s22 = sphi 0, %s20
      %s23 = sphi 0, %s21
      %s24 = sphi 0, %s22
      %s36 = sphi 0, %s38
      %s39 = sphi 0, %s36
      %s40 = sphi 0, %s39
      %s56 = sphi 0, %s40
      %s60 = sphi 0, %s60
      %s62 = sphi 0, %s60
      %s63 = sphi 0, %s62
      %s77 = sphi 0, %s63
      %s81 = sphi 0, %s81
      %s83 = sphi 0, %s81
      %s84 = sphi 0, %s83
      %s98 = sphi 0, %s84
    $region4: #{tpu_custom_call.1} parent=1 // loop_header_branch
      %15 = sbr.rel (%p13) target = $region8
    $region5: #{tpu_custom_call.1} parent=1 // loop_body
      %s17 = ssub.s32 %s12, 1
      %s18 = ssub.s32 %s12, 2
      %s25 = sadd.s32 1, %s20
      %p26 = scmp.ge.s32.totalorder %s25, 1
      %s27 = scalar_select %p26, 0, %s25
      %s28 = sadd.s32 1, %s19
      %s29 = scalar_select %p26, %s28, %s19
      %p30 = scmp.ge.s32.totalorder %s29, 2
      %s31 = scalar_select %p30, 0, %s29
      %s32 = ssub.s32 %s19, %s31
      %s33 = ssub.s32 %s20, %s27
      %s34 = sor.u32 %s32, %s33
      %p35 = scmp.eq.s32.totalorder %s34, 0
      %s37 = sadd.s32 %s36, 1
      %s38 = scalar_select %p35, %s36, %s37
      %p41 = pneg %p35
      %p42 = scmp.eq.s32.totalorder %s12, 1
      %p43 = por %p41, %p42
      %p44 = scmp.ne.s32.totalorder %s36, %s39
      %p45 = scmp.eq.s32.totalorder %s12, 0
      %p46 = por %p44, %p45
      %p47 = scmp.ne.s32.totalorder %s36, %s39
      %p48 = scmp.eq.s32.totalorder %s17, 1
      %p49 = por %p47, %p48
      %p50 = scmp.ne.s32.totalorder %s39, %s40
      %p51 = scmp.eq.s32.totalorder %s17, 0
      %p52 = por %p50, %p51
      %p53 = scmp.ne.s32.totalorder %s39, %s40
      %p54 = scmp.eq.s32.totalorder %s18, 1
      %p55 = por %p53, %p54
      %p57 = scmp.ne.s32.totalorder %s40, %s56
      %p58 = scmp.eq.s32.totalorder %s18, 0
      %p59 = por %p57, %p58
      %s61 = sadd.s32 %s60, 1
      %p64 = scmp.eq.s32.totalorder %s12, 1
      %p65 = scmp.ne.s32.totalorder %s60, %s62
      %p66 = scmp.eq.s32.totalorder %s12, 0
      %p67 = por %p65, %p66
      %p68 = scmp.ne.s32.totalorder %s60, %s62
      %p69 = scmp.eq.s32.totalorder %s17, 1
      %p70 = por %p68, %p69
      %p71 = scmp.ne.s32.totalorder %s62, %s63
      %p72 = scmp.eq.s32.totalorder %s17, 0
      %p73 = por %p71, %p72
      %p74 = scmp.ne.s32.totalorder %s62, %s63
      %p75 = scmp.eq.s32.totalorder %s18, 1
      %p76 = por %p74, %p75
      %p78 = scmp.ne.s32.totalorder %s63, %s77
      %p79 = scmp.eq.s32.totalorder %s18, 0
      %p80 = por %p78, %p79
      %s82 = sadd.s32 %s81, 1
      %p85 = scmp.eq.s32.totalorder %s12, 1
      %p86 = scmp.ne.s32.totalorder %s81, %s83
      %p87 = scmp.eq.s32.totalorder %s12, 0
      %p88 = por %p86, %p87
      %p89 = scmp.ne.s32.totalorder %s81, %s83
      %p90 = scmp.eq.s32.totalorder %s17, 1
      %p91 = por %p89, %p90
      %p92 = scmp.ne.s32.totalorder %s83, %s84
      %p93 = scmp.eq.s32.totalorder %s17, 0
      %p94 = por %p92, %p93
      %p95 = scmp.ne.s32.totalorder %s83, %s84
      %p96 = scmp.eq.s32.totalorder %s18, 1
      %p97 = por %p95, %p96
      %p99 = scmp.ne.s32.totalorder %s84, %s98
      %p100 = scmp.eq.s32.totalorder %s18, 0
      %p101 = por %p99, %p100
      %p102 = scmp.le.s32.totalorder 1, %s12
      %p103 = scmp.lt.s32.totalorder %s12, 3
      %p104 = pnand %p102, %p103
      %p105 = pneg %p104
      // Predicated region
      $region9: #{tpu_custom_call.1} parent=5 // pred_check
        _
      $region10: #{tpu_custom_call.1} parent=5 // pred_check_branch
        %107 = sbr.rel (%p104) target = $region12
      $region11: #{tpu_custom_call.1} parent=5 // pred_region
        %s108 = ssub.s32 %s12, 1
      $region12: #{tpu_custom_call.1} parent=5 // pred_fallthru
        _
      %p109 = scmp.lt.s32.totalorder %s12, 2
      // Predicated region
      $region13: #{tpu_custom_call.1} parent=5 // pred_check
        %p110 = pneg %p109
      $region14: #{tpu_custom_call.1} parent=5 // pred_check_branch
        %112 = sbr.rel (%p110) target = $region16
      $region15: #{tpu_custom_call.1} parent=5 // pred_region
        // Predicated region
        $region17: #{tpu_custom_call.1} parent=15 // pred_check
          %p113 = pneg %p46
        $region18: #{tpu_custom_call.1} parent=15 // pred_check_branch
          %115 = sbr.rel (%p113) target = $region20
        $region19: #{tpu_custom_call.1} parent=15 // pred_region
          %s116 = sand.u32 %s36, 1
          %s117 = scalar_lea.sflag [#allocation3], %s116
          %s118 = sand.u32 %s36, 1
          %s119 = smul.addr %s118, 8
          %s120 = scalar_lea.vmem [#allocation2], %s119
          %s121 = smul.u32 2, %s20
          %s123 = ssub.s32 128, 128
          %124 = vsyncadd %s117, %s123
          %s125 = smul.addr %s19, 2
          %s126 = sadd.s32 %s121, %s125
          %s127 = smul.addr %s126, 64
          %s128 = scalar_lea.hbm %s0, %s127
          %s130 = sshll.u32 %s120, 4
          %s131 = int_to_ptr.vmem [resolvable:$true] %s130
          %133 = dma.hbm_to_vmem [thread:$0]  %s128, 128, %s131, %s117
        $region20: #{tpu_custom_call.1} parent=15 // pred_fallthru
          _
      $region16: #{tpu_custom_call.1} parent=5 // pred_fallthru
        _
      %p134 = scmp.le.s32.totalorder 1, %s12
      %p135 = scmp.lt.s32.totalorder %s12, 3
      %p136 = pnand %p134, %p135
      %p137 = pneg %p136
      // Predicated region
      $region21: #{tpu_custom_call.1} parent=5 // pred_check
        _
      $region22: #{tpu_custom_call.1} parent=5 // pred_check_branch
        %139 = sbr.rel (%p136) target = $region24
      $region23: #{tpu_custom_call.1} parent=5 // pred_region
        %s140 = ssub.s32 %s12, 1
        %s141 = sand.u32 %s39, 1
        %s142 = scalar_lea.sflag [#allocation3], %s141
        %s143 = sand.u32 %s39, 1
        %s144 = smul.addr %s143, 8
        %s145 = scalar_lea.vmem [#allocation2], %s144
        // Predicated region
        $region25: #{tpu_custom_call.1} parent=23 // pred_check
          %p146 = pneg %p52
        $region26: #{tpu_custom_call.1} parent=23 // pred_check_branch
          %148 = sbr.rel (%p146) target = $region28
        $region27: #{tpu_custom_call.1} parent=23 // pred_region
          %149 = dma.done %s142, 128
        $region28: #{tpu_custom_call.1} parent=23 // pred_fallthru
          _
        %s150 = sand.u32 %s39, 1
        %s151 = scalar_lea.sflag [#allocation3], %s150
        %s152 = sand.u32 %s39, 1
        %s153 = smul.addr %s152, 8
        %s154 = scalar_lea.vmem [#allocation2], %s153
        %p155 = pneg %p52
        %p156 = pneg %p49
        %p157 = pneg %p73
        %p158 = pneg %p70
        %p159 = pneg %p94
        %p160 = pneg %p91
        %s161 = smul.u32 2, %s22
        %p162 = scmp.eq.s32.totalorder %s21, 0
        %p163 = scmp.eq.s32.totalorder %s22, 0
        %p164 = pnand %p162, %p163
        %p165 = pneg %p164
        // Predicated region
        $region29: #{tpu_custom_call.1} parent=23 // pred_check
          _
        $region30: #{tpu_custom_call.1} parent=23 // pred_check_branch
          %167 = sbr.rel (%p164) target = $region32
        $region31: #{tpu_custom_call.1} parent=23 // pred_region
          %vm168 = vcmask 3072
          %169 = vst.msk [vmem:[%s1] sm:$0xf] %vm168, 0.0
          %170 = vst.msk [vmem:[%s2] sm:$0xf] %vm168, 0.0
        $region32: #{tpu_custom_call.1} parent=23 // pred_fallthru
          _
        %v171 = vld [vmem:[%s145] sm:$0xff]
        %v172 = vld [vmem:[%s1] sm:$0xf]
        %v174 = vcombine.high %v171, %v171
        %vm176 = vcmask 1043456
        %v177 = vsel %vm176, %v171, 0.0
        %v178 = vsel %vm176, %v174, 0.0
        %v179 = vadd.f32 %v177, %v178
        %180 = vadd.xlane.f32.xlu0 %v179
        %v181 = vpop.xlane.xlu0 %180
        %v182 = vadd.f32 %v172, %v181
        %vm183 = vcmask 3072
        %184 = vst.msk [vmem:[%s1] sm:$0xf] %vm183, %v182
        %v185 = vld [vmem:[%s2] sm:$0xf]
        %v186 = vmul.f32 %v171, %v171
        %v188 = vcombine.high %v186, %v186
        %v190 = vsel %vm176, %v186, 0.0
        %v191 = vsel %vm176, %v188, 0.0
        %v192 = vadd.f32 %v190, %v191
        %193 = vadd.xlane.f32.xlu0 %v192
        %v194 = vpop.xlane.xlu0 %193
        %v195 = vadd.f32 %v185, %v194
        %196 = vst.msk [vmem:[%s2] sm:$0xf] %vm183, %v195
        // Predicated region
        $region33: #{tpu_custom_call.1} parent=23 // pred_check
          %p197 = pneg %p70
        $region34: #{tpu_custom_call.1} parent=23 // pred_check_branch
          %199 = sbr.rel (%p197) target = $region36
        $region35: #{tpu_custom_call.1} parent=23 // pred_region
          _
        $region36: #{tpu_custom_call.1} parent=23 // pred_fallthru
          _
        // Predicated region
        $region37: #{tpu_custom_call.1} parent=23 // pred_check
          %p200 = pneg %p91
        $region38: #{tpu_custom_call.1} parent=23 // pred_check_branch
          %202 = sbr.rel (%p200) target = $region40
        $region39: #{tpu_custom_call.1} parent=23 // pred_region
          _
        $region40: #{tpu_custom_call.1} parent=23 // pred_fallthru
          _
        // Predicated region
        $region41: #{tpu_custom_call.1} parent=23 // pred_check
          %p203 = pneg %p70
        $region42: #{tpu_custom_call.1} parent=23 // pred_check_branch
          %205 = sbr.rel (%p203) target = $region44
        $region43: #{tpu_custom_call.1} parent=23 // pred_region
          _
        $region44: #{tpu_custom_call.1} parent=23 // pred_fallthru
          _
        // Predicated region
        $region45: #{tpu_custom_call.1} parent=23 // pred_check
          %p206 = pneg %p91
        $region46: #{tpu_custom_call.1} parent=23 // pred_check_branch
          %208 = sbr.rel (%p206) target = $region48
        $region47: #{tpu_custom_call.1} parent=23 // pred_region
          _
        $region48: #{tpu_custom_call.1} parent=23 // pred_fallthru
          _
      $region24: #{tpu_custom_call.1} parent=5 // pred_fallthru
        _
      %p209 = scmp.le.s32.totalorder 2, %s12
      // Predicated region
      $region49: #{tpu_custom_call.1} parent=5 // pred_check
        %p210 = pneg %p209
      $region50: #{tpu_custom_call.1} parent=5 // pred_check_branch
        %212 = sbr.rel (%p210) target = $region52
      $region51: #{tpu_custom_call.1} parent=5 // pred_region
        %s213 = ssub.s32 %s12, 2
      $region52: #{tpu_custom_call.1} parent=5 // pred_fallthru
        _
    $region6: #{tpu_custom_call.1} parent=1 // loop_footer
      %s16 = sadd.s32 1, %s12
    $region7: #{tpu_custom_call.1} parent=1 // loop_footer_branch
      %11 = sbr.rel target = $region3
    $region8: #{tpu_custom_call.1} parent=1 // loop_exit
      _
    %214 = vsyncpa [#allocation3], 1
    %s215 = scalar_lea.sflag [#allocation3], 1
    %216 = vsyncpa %s215, 1

</llo_original>
